<compile_context>
chip_gen: v6e
topology: v6e:2x2x1
jax: 0.10.0
libtpu: 0.0.40
codegen_flags: <defaults>
</compile_context>

<pallas_src>
from functools import partial

import jax
import jax.numpy as jnp
from jax import lax
from jax.experimental import pallas as pl
from jax.experimental.pallas import tpu as pltpu


def _rescnn_kernel(x_ref,
                   scale1_ref, shift1_ref,
                   w1_ref, cb1_ref,
                   scale2_ref, shift2_ref,
                   w2_ref, cb2_ref,
                   out_ref, *, conv_dtype):
    """One grid step processes a (Bblk, C, L) slab in the caller's layout.

    x_ref              : (Bblk, C, L)       activations
    scale*/shift*/cb*  : (C, 1) float32     BatchNorm affines / conv biases
    w1_ref, w2_ref     : (3, Bblk, C, C)    conv taps (k=0 -> y[l-1], k=1 -> y[l],
                          k=2 -> y[l+1]), pre-broadcast over the batch block so
                          each tap is a single batched MXU dot.
    """
    x = x_ref[...].astype(jnp.float32)                 # (B, C, L)
    B, C, L = x.shape

    zcol = jnp.zeros((B, C, 1), conv_dtype)            # zero "same" padding column
    # Batched dot: (B, Co, Ci) x (B, Ci, L) -> (B, Co, L), f32 accumulation.
    dn = (((2,), (1,)), ((0,), (0,)))

    def conv3(y, w_ref, b_ref):
        y = y.astype(conv_dtype)
        # Shifted taps with exact zero padding (no wrap-around, no masks).
        y_m1 = jnp.concatenate([zcol, y[:, :, :L - 1]], axis=2)   # y[l-1]
        y_p1 = jnp.concatenate([y[:, :, 1:], zcol], axis=2)       # y[l+1]
        acc = lax.dot_general(w_ref[0], y_m1, dn,
                              preferred_element_type=jnp.float32)
        acc += lax.dot_general(w_ref[1], y, dn,
                               preferred_element_type=jnp.float32)
        acc += lax.dot_general(w_ref[2], y_p1, dn,
                               preferred_element_type=jnp.float32)
        return acc + b_ref[...]

    # BN1 + ReLU   (SpatialDropout1d == identity in eval mode).
    y = jnp.maximum(x * scale1_ref[...] + shift1_ref[...], 0.0)
    # conv1, then BN2 as an explicit per-channel f32 affine, then ReLU.
    h = conv3(y, w1_ref, cb1_ref)
    h = jnp.maximum(h * scale2_ref[...] + shift2_ref[...], 0.0)
    # conv2 + residual.
    h = conv3(h, w2_ref, cb2_ref)
    out_ref[...] = (x + h).astype(out_ref.dtype)


def rescnn_block(x, params, *, matmul_dtype=jnp.float32):
    """x: (N, C, L) float32.  params: dict of ResCNNBlock parameters.

    matmul_dtype: MXU operand dtype for the two convs.  bfloat16 is the fast
    path on every generation (the MXU is natively bf16 even on v5e) at a small
    accuracy cost; accumulation and all BN / ReLU / residual math stay float32.
    """
    N, C, L = x.shape
    eps = 1e-3
    # TODO(synk): if C is not a multiple of 8 the kernel is still correct but
    #             relies on implicit sublane padding; pad C upstream for speed.

    # --- fold BatchNorms into per-channel affine scale/shift -----------------
    def bn_affine(g, b, m, v):
        scale = g / jnp.sqrt(v + eps)
        return scale, b - m * scale

    scale1, shift1 = bn_affine(params["g1"], params["b1"], params["m1"], params["v1"])
    scale2, shift2 = bn_affine(params["g2"], params["b2"], params["m2"], params["v2"])

    # --- per-generation VMEM budget -> batch-block size ----------------------
    try:
        vmem_cap = int(pltpu.get_tpu_info().vmem_capacity_bytes)
    except Exception:
        vmem_cap = 64 << 20                      # v7x per-core VMEM (worst case)
    vmem_limit = int(min(vmem_cap * 3 // 4, 112 << 20))
    wbytes = jnp.dtype(matmul_dtype).itemsize
    # Per batch item: 2x double-buffered in/out blocks + ~8 live f32
    # temporaries + 6 resident per-tap weight copies.
    per_item = 12 * C * L * 4 + 6 * C * C * wbytes
    bblk_max = max(1, (vmem_limit // 2) // per_item)
    # Keep >= 2 grid steps (when N >= 2) so the "parallel" axis can shard over
    # both v7x TensorCores; pick the largest divisor of N under the cap so no
    # batch padding (and no post-kernel slice copy) is ever needed.
    cap = min(bblk_max, max(1, N // 2)) if N >= 2 else 1
    bblk = 1
    for d in range(min(cap, N), 0, -1):
        if N % d == 0:
            bblk = d
            break
    grid_n = N // bblk
    # TODO(synk): a single (bblk, C, L) slab must fit the VMEM budget; L-tiling
    #             with halo exchange for very large C*L is not implemented.

    # --- pack parameters ------------------------------------------------------
    def vec(a):
        return jnp.asarray(a, jnp.float32).reshape(C, 1)

    def taps(w):  # (Co, Ci, 3) -> (3, Bblk, Co, Ci), broadcast over batch block
        wt = jnp.transpose(jnp.asarray(w), (2, 0, 1))
        return jnp.broadcast_to(wt[:, None], (3, bblk, C, C)).astype(matmul_dtype)

    scale1, shift1 = vec(scale1), vec(shift1)
    scale2, shift2 = vec(scale2), vec(shift2)
    cb1, cb2 = vec(params["cb1"]), vec(params["cb2"])
    w1b, w2b = taps(params["w1"]), taps(params["w2"])

    x_spec = pl.BlockSpec((bblk, C, L), lambda i: (i, 0, 0))
    c_spec = pl.BlockSpec((C, 1), lambda i: (0, 0))
    w_spec = pl.BlockSpec((3, bblk, C, C), lambda i: (0, 0, 0, 0))

    return pl.pallas_call(
        partial(_rescnn_kernel, conv_dtype=matmul_dtype),
        out_shape=jax.ShapeDtypeStruct((N, C, L), x.dtype),
        grid=(grid_n,),
        in_specs=[x_spec, c_spec, c_spec, w_spec, c_spec,
                  c_spec, c_spec, w_spec, c_spec],
        out_specs=pl.BlockSpec((bblk, C, L), lambda i: (i, 0, 0)),
        compiler_params=pltpu.CompilerParams(
            dimension_semantics=("parallel",),
            vmem_limit_bytes=vmem_limit),
    )(x, scale1, shift1, w1b, cb1, scale2, shift2, w2b, cb2)


def _reference(x, params):
    """Pure-JAX reference of the eval-mode forward (for verification)."""
    eps = 1e-3

    def bn(v, g, b, m, var):
        return (v - m[None, :, None]) / jnp.sqrt(var[None, :, None] + eps) \
               * g[None, :, None] + b[None, :, None]

    def conv1d(v, w, b):  # v: (N,C,L), w: (Co,Ci,3), pad=1
        vp = jnp.pad(v, ((0, 0), (0, 0), (1, 1)))
        out = jnp.zeros_like(v)
        L = v.shape[-1]
        for k in range(3):
            out = out + jnp.einsum("oi,nil->nol", w[:, :, k], vp[:, :, k:k + L])
        return out + b[None, :, None]

    y = jax.nn.relu(bn(x, params["g1"], params["b1"], params["m1"], params["v1"]))
    y = conv1d(y, params["w1"], params["cb1"])
    y = jax.nn.relu(bn(y, params["g2"], params["b2"], params["m2"], params["v2"]))
    y = conv1d(y, params["w2"], params["cb2"])
    return x + y


if __name__ == "__main__":
    N, C, L, K = 2, 8, 16, 3  # batch, filters, seq length, kernel size (ker=3)

    key = jax.random.PRNGKey(0)
    keys = jax.random.split(key, 12)
    params = {
        # BatchNorm1d #1
        "g1": jax.random.uniform(keys[0], (C,), jnp.float32, 0.5, 1.5),
        "b1": jax.random.normal(keys[1], (C,), jnp.float32) * 0.1,
        "m1": jax.random.normal(keys[2], (C,), jnp.float32) * 0.1,
        "v1": jax.random.uniform(keys[3], (C,), jnp.float32, 0.5, 1.5),
        # Conv1d #1  (filters, filters, ker)
        "w1": jax.random.normal(keys[4], (C, C, K), jnp.float32) * 0.1,
        "cb1": jax.random.normal(keys[5], (C,), jnp.float32) * 0.1,
        # BatchNorm1d #2
        "g2": jax.random.uniform(keys[6], (C,), jnp.float32, 0.5, 1.5),
        "b2": jax.random.normal(keys[7], (C,), jnp.float32) * 0.1,
        "m2": jax.random.normal(keys[8], (C,), jnp.float32) * 0.1,
        "v2": jax.random.uniform(keys[9], (C,), jnp.float32, 0.5, 1.5),
        # Conv1d #2
        "w2": jax.random.normal(keys[10], (C, C, K), jnp.float32) * 0.1,
        "cb2": jax.random.normal(keys[11], (C,), jnp.float32) * 0.1,
    }

    x = jax.random.normal(jax.random.PRNGKey(42), (N, C, L), jnp.float32)

    ref = _reference(x, params)

    # Accurate path (f32 MXU operands).
    out = jax.block_until_ready(rescnn_block(x, params))
    assert out.shape == (N, C, L)
    assert jnp.allclose(out, ref, atol=2e-5, rtol=2e-5), \
        f"f32 max err {jnp.max(jnp.abs(out - ref))}"

    # Fast path (bf16 MXU operands, f32 accumulation & elementwise math).
    out_bf16 = jax.block_until_ready(
        rescnn_block(x, params, matmul_dtype=jnp.bfloat16))
    assert jnp.allclose(out_bf16, ref, atol=5e-2, rtol=5e-2), \
        f"bf16 max err {jnp.max(jnp.abs(out_bf16 - ref))}"

    print("KERNEL_OK")
</pallas_src>

<mosaic_0001>
module attributes {stable_mosaic.version = 11 : i64} {
  func.func @_rescnn_kernel(%arg0: i32, %arg1: memref<1x8x16xf32, #tpu.memory_space<vmem>>, %arg2: memref<8x1xf32, #tpu.memory_space<vmem>>, %arg3: memref<8x1xf32, #tpu.memory_space<vmem>>, %arg4: memref<3x1x8x8xf32, #tpu.memory_space<vmem>>, %arg5: memref<8x1xf32, #tpu.memory_space<vmem>>, %arg6: memref<8x1xf32, #tpu.memory_space<vmem>>, %arg7: memref<8x1xf32, #tpu.memory_space<vmem>>, %arg8: memref<3x1x8x8xf32, #tpu.memory_space<vmem>>, %arg9: memref<8x1xf32, #tpu.memory_space<vmem>>, %arg10: memref<1x8x16xf32, #tpu.memory_space<vmem>>) attributes {dimension_semantics = [#tpu.dimension_semantics<parallel>], iteration_bounds = array<i64: 2>, scalar_prefetch = 0 : i64, scratch_operands = 0 : i64, tpu.core_type = #tpu.core_type<tc>, window_params = [{transform_indices = @transform_0, window_bounds = array<i64: 1, 8, 16>}, {pipeline_mode = #tpu.pipeline_mode<synchronous>, transform_indices = @transform_1, window_bounds = array<i64: 8, 1>}, {pipeline_mode = #tpu.pipeline_mode<synchronous>, transform_indices = @transform_2, window_bounds = array<i64: 8, 1>}, {pipeline_mode = #tpu.pipeline_mode<synchronous>, transform_indices = @transform_3, window_bounds = array<i64: 3, 1, 8, 8>}, {pipeline_mode = #tpu.pipeline_mode<synchronous>, transform_indices = @transform_4, window_bounds = array<i64: 8, 1>}, {pipeline_mode = #tpu.pipeline_mode<synchronous>, transform_indices = @transform_5, window_bounds = array<i64: 8, 1>}, {pipeline_mode = #tpu.pipeline_mode<synchronous>, transform_indices = @transform_6, window_bounds = array<i64: 8, 1>}, {pipeline_mode = #tpu.pipeline_mode<synchronous>, transform_indices = @transform_7, window_bounds = array<i64: 3, 1, 8, 8>}, {pipeline_mode = #tpu.pipeline_mode<synchronous>, transform_indices = @transform_8, window_bounds = array<i64: 8, 1>}, {transform_indices = @transform_9, window_bounds = array<i64: 1, 8, 16>}]} {
    %c0 = arith.constant 0 : index
    %c0_0 = arith.constant 0 : index
    %c0_1 = arith.constant 0 : index
    %0 = vector.load %arg1[%c0, %c0_0, %c0_1] : memref<1x8x16xf32, #tpu.memory_space<vmem>>, vector<1x8x16xf32>
    %cst = arith.constant 0.000000e+00 : f32
    %1 = vector.broadcast %cst : f32 to vector<1x8x1xf32>
    %c0_2 = arith.constant 0 : index
    %c0_3 = arith.constant 0 : index
    %2 = vector.load %arg2[%c0_2, %c0_3] : memref<8x1xf32, #tpu.memory_space<vmem>>, vector<8x1xf32>
    %3 = vector.shape_cast %2 : vector<8x1xf32> to vector<1x8x1xf32>
    %4 = vector.broadcast %3 : vector<1x8x1xf32> to vector<1x8x16xf32>
    %5 = arith.mulf %0, %4 : vector<1x8x16xf32>
    %c0_4 = arith.constant 0 : index
    %c0_5 = arith.constant 0 : index
    %6 = vector.load %arg3[%c0_4, %c0_5] : memref<8x1xf32, #tpu.memory_space<vmem>>, vector<8x1xf32>
    %7 = vector.shape_cast %6 : vector<8x1xf32> to vector<1x8x1xf32>
    %8 = vector.broadcast %7 : vector<1x8x1xf32> to vector<1x8x16xf32>
    %9 = arith.addf %5, %8 : vector<1x8x16xf32>
    %cst_6 = arith.constant 0.000000e+00 : f32
    %10 = vector.broadcast %cst_6 : f32 to vector<1x8x16xf32>
    %11 = arith.maximumf %9, %10 : vector<1x8x16xf32>
    %12 = vector.extract_strided_slice %11 {offsets = [0, 0, 0], sizes = [1, 8, 15], strides = [1, 1, 1]} : vector<1x8x16xf32> to vector<1x8x15xf32>
    %13 = tpu.concatenate %1, %12 in 2 : vector<1x8x1xf32>, vector<1x8x15xf32> -> vector<1x8x16xf32>
    %14 = vector.extract_strided_slice %11 {offsets = [0, 0, 1], sizes = [1, 8, 15], strides = [1, 1, 1]} : vector<1x8x16xf32> to vector<1x8x15xf32>
    %15 = tpu.concatenate %14, %1 in 2 : vector<1x8x15xf32>, vector<1x8x1xf32> -> vector<1x8x16xf32>
    %c0_7 = arith.constant 0 : index
    %c0_8 = arith.constant 0 : index
    %c0_9 = arith.constant 0 : index
    %c0_10 = arith.constant 0 : index
    %16 = vector.load %arg4[%c0_7, %c0_8, %c0_9, %c0_10] : memref<3x1x8x8xf32, #tpu.memory_space<vmem>>, vector<1x1x8x8xf32>
    %17 = vector.shape_cast %16 : vector<1x1x8x8xf32> to vector<1x8x8xf32>
    %cst_11 = arith.constant dense<0.000000e+00> : vector<1x8x16xf32>
    %18 = tpu.matmul %17, %13, %cst_11 {dimension_numbers = #tpu.dot_dimension_numbers<[2], [1], [1], [2], [0, 0, 0, 1, 1, 2], [0], [0]>} : vector<1x8x8xf32>, vector<1x8x16xf32>, vector<1x8x16xf32> -> vector<1x8x16xf32>
    %c1 = arith.constant 1 : index
    %c0_12 = arith.constant 0 : index
    %c0_13 = arith.constant 0 : index
    %c0_14 = arith.constant 0 : index
    %19 = vector.load %arg4[%c1, %c0_12, %c0_13, %c0_14] : memref<3x1x8x8xf32, #tpu.memory_space<vmem>>, vector<1x1x8x8xf32>
    %20 = vector.shape_cast %19 : vector<1x1x8x8xf32> to vector<1x8x8xf32>
    %cst_15 = arith.constant dense<0.000000e+00> : vector<1x8x16xf32>
    %21 = tpu.matmul %20, %11, %cst_15 {dimension_numbers = #tpu.dot_dimension_numbers<[2], [1], [1], [2], [0, 0, 0, 1, 1, 2], [0], [0]>} : vector<1x8x8xf32>, vector<1x8x16xf32>, vector<1x8x16xf32> -> vector<1x8x16xf32>
    %22 = arith.addf %18, %21 : vector<1x8x16xf32>
    %c2 = arith.constant 2 : index
    %c0_16 = arith.constant 0 : index
    %c0_17 = arith.constant 0 : index
    %c0_18 = arith.constant 0 : index
    %23 = vector.load %arg4[%c2, %c0_16, %c0_17, %c0_18] : memref<3x1x8x8xf32, #tpu.memory_space<vmem>>, vector<1x1x8x8xf32>
    %24 = vector.shape_cast %23 : vector<1x1x8x8xf32> to vector<1x8x8xf32>
    %cst_19 = arith.constant dense<0.000000e+00> : vector<1x8x16xf32>
    %25 = tpu.matmul %24, %15, %cst_19 {dimension_numbers = #tpu.dot_dimension_numbers<[2], [1], [1], [2], [0, 0, 0, 1, 1, 2], [0], [0]>} : vector<1x8x8xf32>, vector<1x8x16xf32>, vector<1x8x16xf32> -> vector<1x8x16xf32>
    %26 = arith.addf %22, %25 : vector<1x8x16xf32>
    %c0_20 = arith.constant 0 : index
    %c0_21 = arith.constant 0 : index
    %27 = vector.load %arg5[%c0_20, %c0_21] : memref<8x1xf32, #tpu.memory_space<vmem>>, vector<8x1xf32>
    %28 = vector.shape_cast %27 : vector<8x1xf32> to vector<1x8x1xf32>
    %29 = vector.broadcast %28 : vector<1x8x1xf32> to vector<1x8x16xf32>
    %30 = arith.addf %26, %29 : vector<1x8x16xf32>
    %c0_22 = arith.constant 0 : index
    %c0_23 = arith.constant 0 : index
    %31 = vector.load %arg6[%c0_22, %c0_23] : memref<8x1xf32, #tpu.memory_space<vmem>>, vector<8x1xf32>
    %32 = vector.shape_cast %31 : vector<8x1xf32> to vector<1x8x1xf32>
    %33 = vector.broadcast %32 : vector<1x8x1xf32> to vector<1x8x16xf32>
    %34 = arith.mulf %30, %33 : vector<1x8x16xf32>
    %c0_24 = arith.constant 0 : index
    %c0_25 = arith.constant 0 : index
    %35 = vector.load %arg7[%c0_24, %c0_25] : memref<8x1xf32, #tpu.memory_space<vmem>>, vector<8x1xf32>
    %36 = vector.shape_cast %35 : vector<8x1xf32> to vector<1x8x1xf32>
    %37 = vector.broadcast %36 : vector<1x8x1xf32> to vector<1x8x16xf32>
    %38 = arith.addf %34, %37 : vector<1x8x16xf32>
    %cst_26 = arith.constant 0.000000e+00 : f32
    %39 = vector.broadcast %cst_26 : f32 to vector<1x8x16xf32>
    %40 = arith.maximumf %38, %39 : vector<1x8x16xf32>
    %41 = vector.extract_strided_slice %40 {offsets = [0, 0, 0], sizes = [1, 8, 15], strides = [1, 1, 1]} : vector<1x8x16xf32> to vector<1x8x15xf32>
    %42 = tpu.concatenate %1, %41 in 2 : vector<1x8x1xf32>, vector<1x8x15xf32> -> vector<1x8x16xf32>
    %43 = vector.extract_strided_slice %40 {offsets = [0, 0, 1], sizes = [1, 8, 15], strides = [1, 1, 1]} : vector<1x8x16xf32> to vector<1x8x15xf32>
    %44 = tpu.concatenate %43, %1 in 2 : vector<1x8x15xf32>, vector<1x8x1xf32> -> vector<1x8x16xf32>
    %c0_27 = arith.constant 0 : index
    %c0_28 = arith.constant 0 : index
    %c0_29 = arith.constant 0 : index
    %c0_30 = arith.constant 0 : index
    %45 = vector.load %arg8[%c0_27, %c0_28, %c0_29, %c0_30] : memref<3x1x8x8xf32, #tpu.memory_space<vmem>>, vector<1x1x8x8xf32>
    %46 = vector.shape_cast %45 : vector<1x1x8x8xf32> to vector<1x8x8xf32>
    %cst_31 = arith.constant dense<0.000000e+00> : vector<1x8x16xf32>
    %47 = tpu.matmul %46, %42, %cst_31 {dimension_numbers = #tpu.dot_dimension_numbers<[2], [1], [1], [2], [0, 0, 0, 1, 1, 2], [0], [0]>} : vector<1x8x8xf32>, vector<1x8x16xf32>, vector<1x8x16xf32> -> vector<1x8x16xf32>
    %c1_32 = arith.constant 1 : index
    %c0_33 = arith.constant 0 : index
    %c0_34 = arith.constant 0 : index
    %c0_35 = arith.constant 0 : index
    %48 = vector.load %arg8[%c1_32, %c0_33, %c0_34, %c0_35] : memref<3x1x8x8xf32, #tpu.memory_space<vmem>>, vector<1x1x8x8xf32>
    %49 = vector.shape_cast %48 : vector<1x1x8x8xf32> to vector<1x8x8xf32>
    %cst_36 = arith.constant dense<0.000000e+00> : vector<1x8x16xf32>
    %50 = tpu.matmul %49, %40, %cst_36 {dimension_numbers = #tpu.dot_dimension_numbers<[2], [1], [1], [2], [0, 0, 0, 1, 1, 2], [0], [0]>} : vector<1x8x8xf32>, vector<1x8x16xf32>, vector<1x8x16xf32> -> vector<1x8x16xf32>
    %51 = arith.addf %47, %50 : vector<1x8x16xf32>
    %c2_37 = arith.constant 2 : index
    %c0_38 = arith.constant 0 : index
    %c0_39 = arith.constant 0 : index
    %c0_40 = arith.constant 0 : index
    %52 = vector.load %arg8[%c2_37, %c0_38, %c0_39, %c0_40] : memref<3x1x8x8xf32, #tpu.memory_space<vmem>>, vector<1x1x8x8xf32>
    %53 = vector.shape_cast %52 : vector<1x1x8x8xf32> to vector<1x8x8xf32>
    %cst_41 = arith.constant dense<0.000000e+00> : vector<1x8x16xf32>
    %54 = tpu.matmul %53, %44, %cst_41 {dimension_numbers = #tpu.dot_dimension_numbers<[2], [1], [1], [2], [0, 0, 0, 1, 1, 2], [0], [0]>} : vector<1x8x8xf32>, vector<1x8x16xf32>, vector<1x8x16xf32> -> vector<1x8x16xf32>
    %55 = arith.addf %51, %54 : vector<1x8x16xf32>
    %c0_42 = arith.constant 0 : index
    %c0_43 = arith.constant 0 : index
    %56 = vector.load %arg9[%c0_42, %c0_43] : memref<8x1xf32, #tpu.memory_space<vmem>>, vector<8x1xf32>
    %57 = vector.shape_cast %56 : vector<8x1xf32> to vector<1x8x1xf32>
    %58 = vector.broadcast %57 : vector<1x8x1xf32> to vector<1x8x16xf32>
    %59 = arith.addf %55, %58 : vector<1x8x16xf32>
    %60 = arith.addf %0, %59 : vector<1x8x16xf32>
    %c0_44 = arith.constant 0 : index
    %c0_45 = arith.constant 0 : index
    %c0_46 = arith.constant 0 : index
    %61 = vector.load %arg10[%c0_44, %c0_45, %c0_46] : memref<1x8x16xf32, #tpu.memory_space<vmem>>, vector<1x8x16xf32>
    tpu.vector_store %arg10[%c0_44, %c0_45, %c0_46], %60 {strides = array<i32>} : memref<1x8x16xf32, #tpu.memory_space<vmem>>, vector<1x8x16xf32>,
    return
  }
  func.func @transform_0(%arg0: i32) -> (i32, i32, i32) {
    %c0_i32 = arith.constant 0 : i32
    %c0_i32_0 = arith.constant 0 : i32
    %c0_i32_1 = arith.constant 0 : i32
    return %arg0, %c0_i32, %c0_i32_0 : i32, i32, i32
  }
  func.func @transform_1(%arg0: i32) -> (i32, i32) {
    %c0_i32 = arith.constant 0 : i32
    %c0_i32_0 = arith.constant 0 : i32
    %c0_i32_1 = arith.constant 0 : i32
    return %c0_i32, %c0_i32_0 : i32, i32
  }
  func.func @transform_2(%arg0: i32) -> (i32, i32) {
    %c0_i32 = arith.constant 0 : i32
    %c0_i32_0 = arith.constant 0 : i32
    %c0_i32_1 = arith.constant 0 : i32
    return %c0_i32, %c0_i32_0 : i32, i32
  }
  func.func @transform_3(%arg0: i32) -> (i32, i32, i32, i32) {
    %c0_i32 = arith.constant 0 : i32
    %c0_i32_0 = arith.constant 0 : i32
    %c0_i32_1 = arith.constant 0 : i32
    %c0_i32_2 = arith.constant 0 : i32
    %c0_i32_3 = arith.constant 0 : i32
    return %c0_i32, %c0_i32_0, %c0_i32_1, %c0_i32_2 : i32, i32, i32, i32
  }
  func.func @transform_4(%arg0: i32) -> (i32, i32) {
    %c0_i32 = arith.constant 0 : i32
    %c0_i32_0 = arith.constant 0 : i32
    %c0_i32_1 = arith.constant 0 : i32
    return %c0_i32, %c0_i32_0 : i32, i32
  }
  func.func @transform_5(%arg0: i32) -> (i32, i32) {
    %c0_i32 = arith.constant 0 : i32
    %c0_i32_0 = arith.constant 0 : i32
    %c0_i32_1 = arith.constant 0 : i32
    return %c0_i32, %c0_i32_0 : i32, i32
  }
  func.func @transform_6(%arg0: i32) -> (i32, i32) {
    %c0_i32 = arith.constant 0 : i32
    %c0_i32_0 = arith.constant 0 : i32
    %c0_i32_1 = arith.constant 0 : i32
    return %c0_i32, %c0_i32_0 : i32, i32
  }
  func.func @transform_7(%arg0: i32) -> (i32, i32, i32, i32) {
    %c0_i32 = arith.constant 0 : i32
    %c0_i32_0 = arith.constant 0 : i32
    %c0_i32_1 = arith.constant 0 : i32
    %c0_i32_2 = arith.constant 0 : i32
    %c0_i32_3 = arith.constant 0 : i32
    return %c0_i32, %c0_i32_0, %c0_i32_1, %c0_i32_2 : i32, i32, i32, i32
  }
  func.func @transform_8(%arg0: i32) -> (i32, i32) {
    %c0_i32 = arith.constant 0 : i32
    %c0_i32_0 = arith.constant 0 : i32
    %c0_i32_1 = arith.constant 0 : i32
    return %c0_i32, %c0_i32_0 : i32, i32
  }
  func.func @transform_9(%arg0: i32) -> (i32, i32, i32) {
    %c0_i32 = arith.constant 0 : i32
    %c0_i32_0 = arith.constant 0 : i32
    %c0_i32_1 = arith.constant 0 : i32
    return %arg0, %c0_i32, %c0_i32_0 : i32, i32, i32
  }
}

</mosaic_0001>

<llo_original>
// kernel: tpu_custom_call.1
$region0: #{tpu_custom_call.1}
  #allocation0 [shape = 'u32[]', space=smem, size = 0x4, offset = 0x4, fixed_abs, tag = 'smem constant byte address 0x4 - core index']
  #allocation1 [shape = 'u32[144,128]{1,0:T(1,128)}', space=vmem, size = 0x12000, scoped, tag = 'internal scratch']
  %s0 = inlined_call_operand.hbm [shape: f32[2,8,16], index: 0, kind: input, shape index: {}]
  %s1 = inlined_call_operand.vmem [shape: f32[8,1], index: 1, kind: input, shape index: {}]
  %s2 = inlined_call_operand.vmem [shape: f32[8,1], index: 2, kind: input, shape index: {}]
  %s3 = inlined_call_operand.vmem [shape: f32[3,1,8,8], index: 3, kind: input, shape index: {}]
  %s4 = inlined_call_operand.vmem [shape: f32[8,1], index: 4, kind: input, shape index: {}]
  %s5 = inlined_call_operand.vmem [shape: f32[8,1], index: 5, kind: input, shape index: {}]
  %s6 = inlined_call_operand.vmem [shape: f32[8,1], index: 6, kind: input, shape index: {}]
  %s7 = inlined_call_operand.vmem [shape: f32[3,1,8,8], index: 7, kind: input, shape index: {}]
  %s8 = inlined_call_operand.vmem [shape: f32[8,1], index: 8, kind: input, shape index: {}]
  %s9 = inlined_call_operand.hbm [shape: f32[2,8,16], index: 9, kind: output, shape index: {}]
  %s10 = sld [smem:[#allocation0]]
  $region73: #{tpu_custom_call.1} parent=0
    _
  %s12 = ssub.s32 1, %s10
  %s13 = scalar_select 0, %s12, %s10
  $region1: #{tpu_custom_call.1} parent=0
    #allocation2 [shape = 'u8[8192]{0}', space=vmem, size = 0x2000, scoped, tag = 'input window, operand 0']
    #allocation3 [shape = 's32[2]{0}', space=sflag, size = 0x8, scoped, tag = 'scoped memory for tpu_custom_call.1']
    #allocation4 [shape = 's32[2]{0}', space=sflag, size = 0x8, scoped, tag = 'scoped memory for tpu_custom_call.1']
    #allocation5 [shape = 'u8[8192]{0}', space=vmem, size = 0x2000, scoped, tag = 'output window, operand 0']
    %14 = vsyncpa [#allocation3], 0
    %s15 = scalar_lea.sflag [#allocation3], 1
    %16 = vsyncpa %s15, 0
    %17 = vsyncpa [#allocation4], 0
    %s18 = scalar_lea.sflag [#allocation4], 1
    %19 = vsyncpa %s18, 0
    loop: start=0, step=1, limit=4
    $region2: #{tpu_custom_call.1} parent=1 // loop_pre_header
      _
    $region3: #{tpu_custom_call.1} parent=1 // loop_header
      %s21 = sphi 0, %s25
      %p22 = scmp.ge.s32.totalorder %s21, 4
      %s31 = sphi 0, %s33
      %s34 = sphi 0, %s31
      %s35 = sphi 0, %s34
      %s51 = sphi 0, %s35
      %s55 = sphi 0, %s55
      %s57 = sphi 0, %s55
      %s58 = sphi 0, %s57
      %s72 = sphi 0, %s58
      %s76 = sphi 0, %s76
      %s78 = sphi 0, %s76
      %s79 = sphi 0, %s78
      %s93 = sphi 0, %s79
      %s97 = sphi 0, %s97
      %s99 = sphi 0, %s97
      %s100 = sphi 0, %s99
      %s114 = sphi 0, %s100
      %s118 = sphi 0, %s118
      %s120 = sphi 0, %s118
      %s121 = sphi 0, %s120
      %s135 = sphi 0, %s121
      %s139 = sphi 0, %s139
      %s141 = sphi 0, %s139
      %s142 = sphi 0, %s141
      %s156 = sphi 0, %s142
      %s160 = sphi 0, %s160
      %s162 = sphi 0, %s160
      %s163 = sphi 0, %s162
      %s177 = sphi 0, %s163
      %s181 = sphi 0, %s181
      %s183 = sphi 0, %s181
      %s184 = sphi 0, %s183
      %s198 = sphi 0, %s184
      %s202 = sphi 0, %s202
      %s204 = sphi 0, %s202
      %s205 = sphi 0, %s204
      %s219 = sphi 0, %s205
      %s225 = sphi 0, %s227
      %s228 = sphi 0, %s225
      %s229 = sphi 0, %s228
      %s245 = sphi 0, %s229
    $region4: #{tpu_custom_call.1} parent=1 // loop_header_branch
      %24 = sbr.rel (%p22) target = $region8
    $region5: #{tpu_custom_call.1} parent=1 // loop_body
      %s26 = ssub.s32 %s21, 1
      %s27 = ssub.s32 %s21, 2
      %s28 = sadd.s32 %s21, 1
      %s29 = ssub.s32 %s21, %s28
      %p30 = scmp.eq.s32.totalorder %s29, 0
      %s32 = sadd.s32 %s31, 1
      %s33 = scalar_select %p30, %s31, %s32
      %p36 = pneg %p30
      %p37 = scmp.eq.s32.totalorder %s21, 1
      %p38 = por %p36, %p37
      %p39 = scmp.ne.s32.totalorder %s31, %s34
      %p40 = scmp.eq.s32.totalorder %s21, 0
      %p41 = por %p39, %p40
      %p42 = scmp.ne.s32.totalorder %s31, %s34
      %p43 = scmp.eq.s32.totalorder %s26, 1
      %p44 = por %p42, %p43
      %p45 = scmp.ne.s32.totalorder %s34, %s35
      %p46 = scmp.eq.s32.totalorder %s26, 0
      %p47 = por %p45, %p46
      %p48 = scmp.ne.s32.totalorder %s34, %s35
      %p49 = scmp.eq.s32.totalorder %s27, 1
      %p50 = por %p48, %p49
      %p52 = scmp.ne.s32.totalorder %s35, %s51
      %p53 = scmp.eq.s32.totalorder %s27, 0
      %p54 = por %p52, %p53
      %s56 = sadd.s32 %s55, 1
      %p59 = scmp.eq.s32.totalorder %s21, 1
      %p60 = scmp.ne.s32.totalorder %s55, %s57
      %p61 = scmp.eq.s32.totalorder %s21, 0
      %p62 = por %p60, %p61
      %p63 = scmp.ne.s32.totalorder %s55, %s57
      %p64 = scmp.eq.s32.totalorder %s26, 1
      %p65 = por %p63, %p64
      %p66 = scmp.ne.s32.totalorder %s57, %s58
      %p67 = scmp.eq.s32.totalorder %s26, 0
      %p68 = por %p66, %p67
      %p69 = scmp.ne.s32.totalorder %s57, %s58
      %p70 = scmp.eq.s32.totalorder %s27, 1
      %p71 = por %p69, %p70
      %p73 = scmp.ne.s32.totalorder %s58, %s72
      %p74 = scmp.eq.s32.totalorder %s27, 0
      %p75 = por %p73, %p74
      %s77 = sadd.s32 %s76, 1
      %p80 = scmp.eq.s32.totalorder %s21, 1
      %p81 = scmp.ne.s32.totalorder %s76, %s78
      %p82 = scmp.eq.s32.totalorder %s21, 0
      %p83 = por %p81, %p82
      %p84 = scmp.ne.s32.totalorder %s76, %s78
      %p85 = scmp.eq.s32.totalorder %s26, 1
      %p86 = por %p84, %p85
      %p87 = scmp.ne.s32.totalorder %s78, %s79
      %p88 = scmp.eq.s32.totalorder %s26, 0
      %p89 = por %p87, %p88
      %p90 = scmp.ne.s32.totalorder %s78, %s79
      %p91 = scmp.eq.s32.totalorder %s27, 1
      %p92 = por %p90, %p91
      %p94 = scmp.ne.s32.totalorder %s79, %s93
      %p95 = scmp.eq.s32.totalorder %s27, 0
      %p96 = por %p94, %p95
      %s98 = sadd.s32 %s97, 1
      %p101 = scmp.eq.s32.totalorder %s21, 1
      %p102 = scmp.ne.s32.totalorder %s97, %s99
      %p103 = scmp.eq.s32.totalorder %s21, 0
      %p104 = por %p102, %p103
      %p105 = scmp.ne.s32.totalorder %s97, %s99
      %p106 = scmp.eq.s32.totalorder %s26, 1
      %p107 = por %p105, %p106
      %p108 = scmp.ne.s32.totalorder %s99, %s100
      %p109 = scmp.eq.s32.totalorder %s26, 0
      %p110 = por %p108, %p109
      %p111 = scmp.ne.s32.totalorder %s99, %s100
      %p112 = scmp.eq.s32.totalorder %s27, 1
      %p113 = por %p111, %p112
      %p115 = scmp.ne.s32.totalorder %s100, %s114
      %p116 = scmp.eq.s32.totalorder %s27, 0
      %p117 = por %p115, %p116
      %s119 = sadd.s32 %s118, 1
      %p122 = scmp.eq.s32.totalorder %s21, 1
      %p123 = scmp.ne.s32.totalorder %s118, %s120
      %p124 = scmp.eq.s32.totalorder %s21, 0
      %p125 = por %p123, %p124
      %p126 = scmp.ne.s32.totalorder %s118, %s120
      %p127 = scmp.eq.s32.totalorder %s26, 1
      %p128 = por %p126, %p127
      %p129 = scmp.ne.s32.totalorder %s120, %s121
      %p130 = scmp.eq.s32.totalorder %s26, 0
      %p131 = por %p129, %p130
      %p132 = scmp.ne.s32.totalorder %s120, %s121
      %p133 = scmp.eq.s32.totalorder %s27, 1
      %p134 = por %p132, %p133
      %p136 = scmp.ne.s32.totalorder %s121, %s135
      %p137 = scmp.eq.s32.totalorder %s27, 0
      %p138 = por %p136, %p137
      %s140 = sadd.s32 %s139, 1
      %p143 = scmp.eq.s32.totalorder %s21, 1
      %p144 = scmp.ne.s32.totalorder %s139, %s141
      %p145 = scmp.eq.s32.totalorder %s21, 0
      %p146 = por %p144, %p145
      %p147 = scmp.ne.s32.totalorder %s139, %s141
      %p148 = scmp.eq.s32.totalorder %s26, 1
      %p149 = por %p147, %p148
      %p150 = scmp.ne.s32.totalorder %s141, %s142
      %p151 = scmp.eq.s32.totalorder %s26, 0
      %p152 = por %p150, %p151
      %p153 = scmp.ne.s32.totalorder %s141, %s142
      %p154 = scmp.eq.s32.totalorder %s27, 1
      %p155 = por %p153, %p154
      %p157 = scmp.ne.s32.totalorder %s142, %s156
      %p158 = scmp.eq.s32.totalorder %s27, 0
      %p159 = por %p157, %p158
      %s161 = sadd.s32 %s160, 1
      %p164 = scmp.eq.s32.totalorder %s21, 1
      %p165 = scmp.ne.s32.totalorder %s160, %s162
      %p166 = scmp.eq.s32.totalorder %s21, 0
      %p167 = por %p165, %p166
      %p168 = scmp.ne.s32.totalorder %s160, %s162
      %p169 = scmp.eq.s32.totalorder %s26, 1
      %p170 = por %p168, %p169
      %p171 = scmp.ne.s32.totalorder %s162, %s163
      %p172 = scmp.eq.s32.totalorder %s26, 0
      %p173 = por %p171, %p172
      %p174 = scmp.ne.s32.totalorder %s162, %s163
      %p175 = scmp.eq.s32.totalorder %s27, 1
      %p176 = por %p174, %p175
      %p178 = scmp.ne.s32.totalorder %s163, %s177
      %p179 = scmp.eq.s32.totalorder %s27, 0
      %p180 = por %p178, %p179
      %s182 = sadd.s32 %s181, 1
      %p185 = scmp.eq.s32.totalorder %s21, 1
      %p186 = scmp.ne.s32.totalorder %s181, %s183
      %p187 = scmp.eq.s32.totalorder %s21, 0
      %p188 = por %p186, %p187
      %p189 = scmp.ne.s32.totalorder %s181, %s183
      %p190 = scmp.eq.s32.totalorder %s26, 1
      %p191 = por %p189, %p190
      %p192 = scmp.ne.s32.totalorder %s183, %s184
      %p193 = scmp.eq.s32.totalorder %s26, 0
      %p194 = por %p192, %p193
      %p195 = scmp.ne.s32.totalorder %s183, %s184
      %p196 = scmp.eq.s32.totalorder %s27, 1
      %p197 = por %p195, %p196
      %p199 = scmp.ne.s32.totalorder %s184, %s198
      %p200 = scmp.eq.s32.totalorder %s27, 0
      %p201 = por %p199, %p200
      %s203 = sadd.s32 %s202, 1
      %p206 = scmp.eq.s32.totalorder %s21, 1
      %p207 = scmp.ne.s32.totalorder %s202, %s204
      %p208 = scmp.eq.s32.totalorder %s21, 0
      %p209 = por %p207, %p208
      %p210 = scmp.ne.s32.totalorder %s202, %s204
      %p211 = scmp.eq.s32.totalorder %s26, 1
      %p212 = por %p210, %p211
      %p213 = scmp.ne.s32.totalorder %s204, %s205
      %p214 = scmp.eq.s32.totalorder %s26, 0
      %p215 = por %p213, %p214
      %p216 = scmp.ne.s32.totalorder %s204, %s205
      %p217 = scmp.eq.s32.totalorder %s27, 1
      %p218 = por %p216, %p217
      %p220 = scmp.ne.s32.totalorder %s205, %s219
      %p221 = scmp.eq.s32.totalorder %s27, 0
      %p222 = por %p220, %p221
      %s223 = ssub.s32 %s21, %s28
      %p224 = scmp.eq.s32.totalorder %s223, 0
      %s226 = sadd.s32 %s225, 1
      %s227 = scalar_select %p224, %s225, %s226
      %p230 = pneg %p224
      %p231 = scmp.eq.s32.totalorder %s21, 1
      %p232 = por %p230, %p231
      %p233 = scmp.ne.s32.totalorder %s225, %s228
      %p234 = scmp.eq.s32.totalorder %s21, 0
      %p235 = por %p233, %p234
      %p236 = scmp.ne.s32.totalorder %s225, %s228
      %p237 = scmp.eq.s32.totalorder %s26, 1
      %p238 = por %p236, %p237
      %p239 = scmp.ne.s32.totalorder %s228, %s229
      %p240 = scmp.eq.s32.totalorder %s26, 0
      %p241 = por %p239, %p240
      %p242 = scmp.ne.s32.totalorder %s228, %s229
      %p243 = scmp.eq.s32.totalorder %s27, 1
      %p244 = por %p242, %p243
      %p246 = scmp.ne.s32.totalorder %s229, %s245
      %p247 = scmp.eq.s32.totalorder %s27, 0
      %p248 = por %p246, %p247
      %p249 = scmp.le.s32.totalorder 1, %s21
      %p250 = scmp.lt.s32.totalorder %s21, 3
      %p251 = pnand %p249, %p250
      %p252 = pneg %p251
      // Predicated region
      $region9: #{tpu_custom_call.1} parent=5 // pred_check
        _
      $region10: #{tpu_custom_call.1} parent=5 // pred_check_branch
        %254 = sbr.rel (%p251) target = $region12
      $region11: #{tpu_custom_call.1} parent=5 // pred_region
        %s255 = ssub.s32 %s21, 1
        // Predicated region
        $region13: #{tpu_custom_call.1} parent=11 // pred_check
          %p256 = pneg %p68
        $region14: #{tpu_custom_call.1} parent=11 // pred_check_branch
          %258 = sbr.rel (%p256) target = $region16
        $region15: #{tpu_custom_call.1} parent=11 // pred_region
          _
        $region16: #{tpu_custom_call.1} parent=11 // pred_fallthru
          _
        // Predicated region
        $region17: #{tpu_custom_call.1} parent=11 // pred_check
          %p259 = pneg %p89
        $region18: #{tpu_custom_call.1} parent=11 // pred_check_branch
          %261 = sbr.rel (%p259) target = $region20
        $region19: #{tpu_custom_call.1} parent=11 // pred_region
          _
        $region20: #{tpu_custom_call.1} parent=11 // pred_fallthru
          _
        // Predicated region
        $region21: #{tpu_custom_call.1} parent=11 // pred_check
          %p262 = pneg %p110
        $region22: #{tpu_custom_call.1} parent=11 // pred_check_branch
          %264 = sbr.rel (%p262) target = $region24
        $region23: #{tpu_custom_call.1} parent=11 // pred_region
          _
        $region24: #{tpu_custom_call.1} parent=11 // pred_fallthru
          _
        // Predicated region
        $region25: #{tpu_custom_call.1} parent=11 // pred_check
          %p265 = pneg %p131
        $region26: #{tpu_custom_call.1} parent=11 // pred_check_branch
          %267 = sbr.rel (%p265) target = $region28
        $region27: #{tpu_custom_call.1} parent=11 // pred_region
          _
        $region28: #{tpu_custom_call.1} parent=11 // pred_fallthru
          _
        // Predicated region
        $region29: #{tpu_custom_call.1} parent=11 // pred_check
          %p268 = pneg %p152
        $region30: #{tpu_custom_call.1} parent=11 // pred_check_branch
          %270 = sbr.rel (%p268) target = $region32
        $region31: #{tpu_custom_call.1} parent=11 // pred_region
          _
        $region32: #{tpu_custom_call.1} parent=11 // pred_fallthru
          _
        // Predicated region
        $region33: #{tpu_custom_call.1} parent=11 // pred_check
          %p271 = pneg %p173
        $region34: #{tpu_custom_call.1} parent=11 // pred_check_branch
          %273 = sbr.rel (%p271) target = $region36
        $region35: #{tpu_custom_call.1} parent=11 // pred_region
          _
        $region36: #{tpu_custom_call.1} parent=11 // pred_fallthru
          _
        // Predicated region
        $region37: #{tpu_custom_call.1} parent=11 // pred_check
          %p274 = pneg %p194
        $region38: #{tpu_custom_call.1} parent=11 // pred_check_branch
          %276 = sbr.rel (%p274) target = $region40
        $region39: #{tpu_custom_call.1} parent=11 // pred_region
          _
        $region40: #{tpu_custom_call.1} parent=11 // pred_fallthru
          _
        // Predicated region
        $region41: #{tpu_custom_call.1} parent=11 // pred_check
          %p277 = pneg %p215
        $region42: #{tpu_custom_call.1} parent=11 // pred_check_branch
          %279 = sbr.rel (%p277) target = $region44
        $region43: #{tpu_custom_call.1} parent=11 // pred_region
          _
        $region44: #{tpu_custom_call.1} parent=11 // pred_fallthru
          _
      $region12: #{tpu_custom_call.1} parent=5 // pred_fallthru
        _
      %p280 = scmp.lt.s32.totalorder %s21, 2
      // Predicated region
      $region45: #{tpu_custom_call.1} parent=5 // pred_check
        %p281 = pneg %p280
      $region46: #{tpu_custom_call.1} parent=5 // pred_check_branch
        %283 = sbr.rel (%p281) target = $region48
      $region47: #{tpu_custom_call.1} parent=5 // pred_region
        // Predicated region
        $region49: #{tpu_custom_call.1} parent=47 // pred_check
          %p284 = pneg %p41
        $region50: #{tpu_custom_call.1} parent=47 // pred_check_branch
          %286 = sbr.rel (%p284) target = $region52
        $region51: #{tpu_custom_call.1} parent=47 // pred_region
          %s287 = sand.u32 %s31, 1
          %s288 = scalar_lea.sflag [#allocation3], %s287
          %s289 = sand.u32 %s31, 1
          %s290 = smul.addr %s289, 8
          %s291 = scalar_lea.vmem [#allocation2], %s290
          %s293 = ssub.s32 128, 128
          %294 = vsyncadd %s288, %s293
          %s295 = smul.addr %s21, 128
          %s296 = scalar_lea.hbm %s0, %s295
          %s298 = sshll.u32 %s291, 4
          %s299 = int_to_ptr.vmem [resolvable:$true] %s298
          %301 = dma.hbm_to_vmem [thread:$0]  %s296, 128, %s299, %s288
        $region52: #{tpu_custom_call.1} parent=47 // pred_fallthru
          _
      $region48: #{tpu_custom_call.1} parent=5 // pred_fallthru
        _
      %p302 = scmp.le.s32.totalorder 1, %s21
      %p303 = scmp.lt.s32.totalorder %s21, 3
      %p304 = pnand %p302, %p303
      %p305 = pneg %p304
      // Predicated region
      $region53: #{tpu_custom_call.1} parent=5 // pred_check
        _
      $region54: #{tpu_custom_call.1} parent=5 // pred_check_branch
        %307 = sbr.rel (%p304) target = $region56
      $region55: #{tpu_custom_call.1} parent=5 // pred_region
        %s308 = ssub.s32 %s21, 1
        %s309 = sand.u32 %s34, 1
        %s310 = scalar_lea.sflag [#allocation3], %s309
        %s311 = sand.u32 %s34, 1
        %s312 = smul.addr %s311, 8
        %s313 = scalar_lea.vmem [#allocation2], %s312
        // Predicated region
        $region57: #{tpu_custom_call.1} parent=55 // pred_check
          %p314 = pneg %p47
        $region58: #{tpu_custom_call.1} parent=55 // pred_check_branch
          %316 = sbr.rel (%p314) target = $region60
        $region59: #{tpu_custom_call.1} parent=55 // pred_region
          %317 = dma.done %s310, 128
        $region60: #{tpu_custom_call.1} parent=55 // pred_fallthru
          _
        %s318 = sand.u32 %s34, 1
        %s319 = scalar_lea.sflag [#allocation3], %s318
        %s320 = sand.u32 %s34, 1
        %s321 = smul.addr %s320, 8
        %s322 = scalar_lea.vmem [#allocation2], %s321
        %p323 = pneg %p47
        %p324 = pneg %p44
        %p325 = pneg %p68
        %p326 = pneg %p65
        %p327 = pneg %p89
        %p328 = pneg %p86
        %p329 = pneg %p110
        %p330 = pneg %p107
        %p331 = pneg %p131
        %p332 = pneg %p128
        %p333 = pneg %p152
        %p334 = pneg %p149
        %p335 = pneg %p173
        %p336 = pneg %p170
        %p337 = pneg %p194
        %p338 = pneg %p191
        %p339 = pneg %p215
        %p340 = pneg %p212
        %p341 = pneg %p241
        %p342 = pneg %p238
        %s343 = sand.u32 %s228, 1
        %s344 = scalar_lea.sflag [#allocation4], %s343
        %s345 = sand.u32 %s228, 1
        %s346 = smul.addr %s345, 8
        %s347 = scalar_lea.vmem [#allocation5], %s346
        %v348 = vld [vmem:[%s313] sm:$0xff]
        %v349 = vld [vmem:[%s1] sm:$0xff]
        %351 = vset.pattern.permute.xlu0 0
        %352 = vperm.xlu0 %351, %v349
        %v353 = vpop.permute.xlu0 %352
        %v355 = vmul.f32 %v348, %v353
        %v356 = vld [vmem:[%s2] sm:$0xff]
        %358 = vset.pattern.permute.xlu0 0
        %359 = vperm.xlu0 %358, %v356
        %v360 = vpop.permute.xlu0 %359
        %v362 = vadd.f32 %v355, %v360
        %v363 = vmax.f32 %v362, 0.0
        %365 = vrot.lane.b32.xlu0 %v363, 1
        %v366 = vpop.permute.xlu0 %365
        %vm368 = vcmask 7168
        %v369 = vsel %vm368, 0.0, %v366
        %370 = vrot.lane.b32.xlu0 %v363, 127
        %v371 = vpop.permute.xlu0 %370
        %vm373 = vcmask 121856
        %v374 = vsel %vm373, %v371, 0.0
        %v375 = vld [vmem:[%s3] sm:$0xff]
        %s376 = scalar_lea.vmem %s3, 8
        %v377 = vld [vmem:[%s376] sm:$0xff]
        %vm378 = vcmask 64512
        %v380 = vsel %vm378, %v377, 0
        %382 = vmatprep.subr.mxu0 0.0
        %383 = vmatpush1.msra.mxu0 0.0
        %384 = vmatprep.subr.mxu0 0.0
        %385 = vmatpush1.msra.mxu0 0.0
        %386 = vmatprep.subr.mxu0 0.0
        %387 = vmatpush1.msra.mxu0 0.0
        %388 = vmatprep.subr.mxu0 0.0
        %389 = vmatpush1.msra.mxu0 0.0
        %390 = vmatprep.subr.mxu0 0.0
        %391 = vmatpush1.msra.mxu0 0.0
        %392 = vmatprep.subr.mxu0 0.0
        %393 = vmatpush1.msra.mxu0 0.0
        %394 = vmatprep.subr.mxu0 0.0
        %395 = vmatpush1.msra.mxu0 0.0
        %396 = vmatprep.subr.mxu0 0.0
        %397 = vmatpush1.msra.mxu0 0.0
        %398 = vmatprep.subr.mxu0 0.0
        %399 = vmatpush1.msra.mxu0 0.0
        %400 = vmatprep.subr.mxu0 0.0
        %401 = vmatpush1.msra.mxu0 0.0
        %402 = vmatprep.subr.mxu0 0.0
        %403 = vmatpush1.msra.mxu0 0.0
        %404 = vmatprep.subr.mxu0 0.0
        %405 = vmatpush1.msra.mxu0 0.0
        %406 = vmatprep.subr.mxu0 0.0
        %407 = vmatpush1.msra.mxu0 0.0
        %408 = vmatprep.subr.mxu0 0.0
        %409 = vmatpush1.msra.mxu0 0.0
        %410 = vmatprep.subr.mxu0 0.0
        %411 = vmatpush1.msra.mxu0 0.0
        %412 = vmatprep.subr.mxu0 0.0
        %413 = vmatpush1.msra.mxu0 %v363
        %414 = vmatprep.subr.mxu0 0.0
        %415 = vmatpush2.msra.mxu0 0.0
        %416 = vmatprep.subr.mxu0 0.0
        %417 = vmatpush2.msra.mxu0 0.0
        %418 = vmatprep.subr.mxu0 0.0
        %419 = vmatpush2.msra.mxu0 0.0
        %420 = vmatprep.subr.mxu0 0.0
        %421 = vmatpush2.msra.mxu0 0.0
        %422 = vmatprep.subr.mxu0 0.0
        %423 = vmatpush2.msra.mxu0 0.0
        %424 = vmatprep.subr.mxu0 0.0
        %425 = vmatpush2.msra.mxu0 0.0
        %426 = vmatprep.subr.mxu0 0.0
        %427 = vmatpush2.msra.mxu0 0.0
        %428 = vmatprep.subr.mxu0 0.0
        %429 = vmatpush2.msra.mxu0 0.0
        %430 = vmatprep.subr.mxu0 0.0
        %431 = vmatpush2.msra.mxu0 0.0
        %432 = vmatprep.subr.mxu0 0.0
        %433 = vmatpush2.msra.mxu0 0.0
        %434 = vmatprep.subr.mxu0 0.0
        %435 = vmatpush2.msra.mxu0 0.0
        %436 = vmatprep.subr.mxu0 0.0
        %437 = vmatpush2.msra.mxu0 0.0
        %438 = vmatprep.subr.mxu0 0.0
        %439 = vmatpush2.msra.mxu0 0.0
        %440 = vmatprep.subr.mxu0 0.0
        %441 = vmatpush2.msra.mxu0 0.0
        %442 = vmatprep.subr.mxu0 0.0
        %443 = vmatpush2.msra.mxu0 0.0
        %444 = vmatprep.subr.mxu0 0.0
        %445 = vmatpush2.msra.mxu0 0.0
        %446 = vmatprep.mubr.f32.mxu0 0.0
        %447 = vmatmul.mubr.f32.gmra.mxu0 %v380
        %v448 = vpop.f32.mrf.mxu0
        %v449 = vadd.f32 0.0, %v448
        %v450 = vpop.f32.mrf.mxu0
        %451 = vdwg.mxu0
        %v453 = vsel %vm378, %v375, 0
        %455 = vmatprep.subr.mxu0 0.0
        %456 = vmatpush1.msra.mxu0 0.0
        %457 = vmatprep.subr.mxu0 0.0
        %458 = vmatpush1.msra.mxu0 0.0
        %459 = vmatprep.subr.mxu0 0.0
        %460 = vmatpush1.msra.mxu0 0.0
        %461 = vmatprep.subr.mxu0 0.0
        %462 = vmatpush1.msra.mxu0 0.0
        %463 = vmatprep.subr.mxu0 0.0
        %464 = vmatpush1.msra.mxu0 0.0
        %465 = vmatprep.subr.mxu0 0.0
        %466 = vmatpush1.msra.mxu0 0.0
        %467 = vmatprep.subr.mxu0 0.0
        %468 = vmatpush1.msra.mxu0 0.0
        %469 = vmatprep.subr.mxu0 0.0
        %470 = vmatpush1.msra.mxu0 0.0
        %471 = vmatprep.subr.mxu0 0.0
        %472 = vmatpush1.msra.mxu0 0.0
        %473 = vmatprep.subr.mxu0 0.0
        %474 = vmatpush1.msra.mxu0 0.0
        %475 = vmatprep.subr.mxu0 0.0
        %476 = vmatpush1.msra.mxu0 0.0
        %477 = vmatprep.subr.mxu0 0.0
        %478 = vmatpush1.msra.mxu0 0.0
        %479 = vmatprep.subr.mxu0 0.0
        %480 = vmatpush1.msra.mxu0 0.0
        %481 = vmatprep.subr.mxu0 0.0
        %482 = vmatpush1.msra.mxu0 0.0
        %483 = vmatprep.subr.mxu0 0.0
        %484 = vmatpush1.msra.mxu0 0.0
        %485 = vmatprep.subr.mxu0 0.0
        %486 = vmatpush1.msra.mxu0 %v369
        %487 = vmatprep.subr.mxu0 0.0
        %488 = vmatpush2.msra.mxu0 0.0
        %489 = vmatprep.subr.mxu0 0.0
        %490 = vmatpush2.msra.mxu0 0.0
        %491 = vmatprep.subr.mxu0 0.0
        %492 = vmatpush2.msra.mxu0 0.0
        %493 = vmatprep.subr.mxu0 0.0
        %494 = vmatpush2.msra.mxu0 0.0
        %495 = vmatprep.subr.mxu0 0.0
        %496 = vmatpush2.msra.mxu0 0.0
        %497 = vmatprep.subr.mxu0 0.0
        %498 = vmatpush2.msra.mxu0 0.0
        %499 = vmatprep.subr.mxu0 0.0
        %500 = vmatpush2.msra.mxu0 0.0
        %501 = vmatprep.subr.mxu0 0.0
        %502 = vmatpush2.msra.mxu0 0.0
        %503 = vmatprep.subr.mxu0 0.0
        %504 = vmatpush2.msra.mxu0 0.0
        %505 = vmatprep.subr.mxu0 0.0
        %506 = vmatpush2.msra.mxu0 0.0
        %507 = vmatprep.subr.mxu0 0.0
        %508 = vmatpush2.msra.mxu0 0.0
        %509 = vmatprep.subr.mxu0 0.0
        %510 = vmatpush2.msra.mxu0 0.0
        %511 = vmatprep.subr.mxu0 0.0
        %512 = vmatpush2.msra.mxu0 0.0
        %513 = vmatprep.subr.mxu0 0.0
        %514 = vmatpush2.msra.mxu0 0.0
        %515 = vmatprep.subr.mxu0 0.0
        %516 = vmatpush2.msra.mxu0 0.0
        %517 = vmatprep.subr.mxu0 0.0
        %518 = vmatpush2.msra.mxu0 0.0
        %519 = vmatprep.mubr.f32.mxu0 0.0
        %520 = vmatmul.mubr.f32.gmra.mxu0 %v453
        %v521 = vpop.f32.mrf.mxu0
        %v522 = vadd.f32 %v449, %v521
        %v523 = vpop.f32.mrf.mxu0
        %524 = vdwg.mxu0
        %s525 = scalar_lea.vmem %s3, 16
        %v526 = vld [vmem:[%s525] sm:$0xff]
        %v528 = vsel %vm378, %v526, 0
        %530 = vmatprep.subr.mxu0 0.0
        %531 = vmatpush1.msra.mxu0 0.0
        %532 = vmatprep.subr.mxu0 0.0
        %533 = vmatpush1.msra.mxu0 0.0
        %534 = vmatprep.subr.mxu0 0.0
        %535 = vmatpush1.msra.mxu0 0.0
        %536 = vmatprep.subr.mxu0 0.0
        %537 = vmatpush1.msra.mxu0 0.0
        %538 = vmatprep.subr.mxu0 0.0
        %539 = vmatpush1.msra.mxu0 0.0
        %540 = vmatprep.subr.mxu0 0.0
        %541 = vmatpush1.msra.mxu0 0.0
        %542 = vmatprep.subr.mxu0 0.0
        %543 = vmatpush1.msra.mxu0 0.0
        %544 = vmatprep.subr.mxu0 0.0
        %545 = vmatpush1.msra.mxu0 0.0
        %546 = vmatprep.subr.mxu0 0.0
        %547 = vmatpush1.msra.mxu0 0.0
        %548 = vmatprep.subr.mxu0 0.0
        %549 = vmatpush1.msra.mxu0 0.0
        %550 = vmatprep.subr.mxu0 0.0
        %551 = vmatpush1.msra.mxu0 0.0
        %552 = vmatprep.subr.mxu0 0.0
        %553 = vmatpush1.msra.mxu0 0.0
        %554 = vmatprep.subr.mxu0 0.0
        %555 = vmatpush1.msra.mxu0 0.0
        %556 = vmatprep.subr.mxu0 0.0
        %557 = vmatpush1.msra.mxu0 0.0
        %558 = vmatprep.subr.mxu0 0.0
        %559 = vmatpush1.msra.mxu0 0.0
        %560 = vmatprep.subr.mxu0 0.0
        %561 = vmatpush1.msra.mxu0 %v374
        %562 = vmatprep.subr.mxu0 0.0
        %563 = vmatpush2.msra.mxu0 0.0
        %564 = vmatprep.subr.mxu0 0.0
        %565 = vmatpush2.msra.mxu0 0.0
        %566 = vmatprep.subr.mxu0 0.0
        %567 = vmatpush2.msra.mxu0 0.0
        %568 = vmatprep.subr.mxu0 0.0
        %569 = vmatpush2.msra.mxu0 0.0
        %570 = vmatprep.subr.mxu0 0.0
        %571 = vmatpush2.msra.mxu0 0.0
        %572 = vmatprep.subr.mxu0 0.0
        %573 = vmatpush2.msra.mxu0 0.0
        %574 = vmatprep.subr.mxu0 0.0
        %575 = vmatpush2.msra.mxu0 0.0
        %576 = vmatprep.subr.mxu0 0.0
        %577 = vmatpush2.msra.mxu0 0.0
        %578 = vmatprep.subr.mxu0 0.0
        %579 = vmatpush2.msra.mxu0 0.0
        %580 = vmatprep.subr.mxu0 0.0
        %581 = vmatpush2.msra.mxu0 0.0
        %582 = vmatprep.subr.mxu0 0.0
        %583 = vmatpush2.msra.mxu0 0.0
        %584 = vmatprep.subr.mxu0 0.0
        %585 = vmatpush2.msra.mxu0 0.0
        %586 = vmatprep.subr.mxu0 0.0
        %587 = vmatpush2.msra.mxu0 0.0
        %588 = vmatprep.subr.mxu0 0.0
        %589 = vmatpush2.msra.mxu0 0.0
        %590 = vmatprep.subr.mxu0 0.0
        %591 = vmatpush2.msra.mxu0 0.0
        %592 = vmatprep.subr.mxu0 0.0
        %593 = vmatpush2.msra.mxu0 0.0
        %594 = vmatprep.mubr.f32.mxu0 0.0
        %595 = vmatmul.mubr.f32.gmra.mxu0 %v528
        %v596 = vpop.f32.mrf.mxu0
        %v597 = vadd.f32 0.0, %v596
        %v598 = vpop.f32.mrf.mxu0
        %599 = vdwg.mxu0
        %v600 = vadd.f32 %v522, %v597
        %v601 = vld [vmem:[%s4] sm:$0xff]
        %603 = vset.pattern.permute.xlu0 0
        %604 = vperm.xlu0 %603, %v601
        %v605 = vpop.permute.xlu0 %604
        %v607 = vadd.f32 %v600, %v605
        %v608 = vld [vmem:[%s5] sm:$0xff]
        %610 = vset.pattern.permute.xlu0 0
        %611 = vperm.xlu0 %610, %v608
        %v612 = vpop.permute.xlu0 %611
        %v614 = vmul.f32 %v607, %v612
        %v615 = vld [vmem:[%s6] sm:$0xff]
        %617 = vset.pattern.permute.xlu0 0
        %618 = vperm.xlu0 %617, %v615
        %v619 = vpop.permute.xlu0 %618
        %v621 = vadd.f32 %v614, %v619
        %v622 = vmax.f32 %v621, 0.0
        %624 = vrot.lane.b32.xlu0 %v622, 1
        %v625 = vpop.permute.xlu0 %624
        %v627 = vsel %vm368, 0.0, %v625
        %628 = vrot.lane.b32.xlu0 %v622, 127
        %v629 = vpop.permute.xlu0 %628
        %v631 = vsel %vm373, %v629, 0.0
        %v632 = vld [vmem:[%s7] sm:$0xff]
        %s633 = scalar_lea.vmem %s7, 8
        %v634 = vld [vmem:[%s633] sm:$0xff]
        %v636 = vsel %vm378, %v634, 0
        %638 = vmatprep.subr.mxu0 0.0
        %639 = vmatpush1.msra.mxu0 0.0
        %640 = vmatprep.subr.mxu0 0.0
        %641 = vmatpush1.msra.mxu0 0.0
        %642 = vmatprep.subr.mxu0 0.0
        %643 = vmatpush1.msra.mxu0 0.0
        %644 = vmatprep.subr.mxu0 0.0
        %645 = vmatpush1.msra.mxu0 0.0
        %646 = vmatprep.subr.mxu0 0.0
        %647 = vmatpush1.msra.mxu0 0.0
        %648 = vmatprep.subr.mxu0 0.0
        %649 = vmatpush1.msra.mxu0 0.0
        %650 = vmatprep.subr.mxu0 0.0
        %651 = vmatpush1.msra.mxu0 0.0
        %652 = vmatprep.subr.mxu0 0.0
        %653 = vmatpush1.msra.mxu0 0.0
        %654 = vmatprep.subr.mxu0 0.0
        %655 = vmatpush1.msra.mxu0 0.0
        %656 = vmatprep.subr.mxu0 0.0
        %657 = vmatpush1.msra.mxu0 0.0
        %658 = vmatprep.subr.mxu0 0.0
        %659 = vmatpush1.msra.mxu0 0.0
        %660 = vmatprep.subr.mxu0 0.0
        %661 = vmatpush1.msra.mxu0 0.0
        %662 = vmatprep.subr.mxu0 0.0
        %663 = vmatpush1.msra.mxu0 0.0
        %664 = vmatprep.subr.mxu0 0.0
        %665 = vmatpush1.msra.mxu0 0.0
        %666 = vmatprep.subr.mxu0 0.0
        %667 = vmatpush1.msra.mxu0 0.0
        %668 = vmatprep.subr.mxu0 0.0
        %669 = vmatpush1.msra.mxu0 %v622
        %670 = vmatprep.subr.mxu0 0.0
        %671 = vmatpush2.msra.mxu0 0.0
        %672 = vmatprep.subr.mxu0 0.0
        %673 = vmatpush2.msra.mxu0 0.0
        %674 = vmatprep.subr.mxu0 0.0
        %675 = vmatpush2.msra.mxu0 0.0
        %676 = vmatprep.subr.mxu0 0.0
        %677 = vmatpush2.msra.mxu0 0.0
        %678 = vmatprep.subr.mxu0 0.0
        %679 = vmatpush2.msra.mxu0 0.0
        %680 = vmatprep.subr.mxu0 0.0
        %681 = vmatpush2.msra.mxu0 0.0
        %682 = vmatprep.subr.mxu0 0.0
        %683 = vmatpush2.msra.mxu0 0.0
        %684 = vmatprep.subr.mxu0 0.0
        %685 = vmatpush2.msra.mxu0 0.0
        %686 = vmatprep.subr.mxu0 0.0
        %687 = vmatpush2.msra.mxu0 0.0
        %688 = vmatprep.subr.mxu0 0.0
        %689 = vmatpush2.msra.mxu0 0.0
        %690 = vmatprep.subr.mxu0 0.0
        %691 = vmatpush2.msra.mxu0 0.0
        %692 = vmatprep.subr.mxu0 0.0
        %693 = vmatpush2.msra.mxu0 0.0
        %694 = vmatprep.subr.mxu0 0.0
        %695 = vmatpush2.msra.mxu0 0.0
        %696 = vmatprep.subr.mxu0 0.0
        %697 = vmatpush2.msra.mxu0 0.0
        %698 = vmatprep.subr.mxu0 0.0
        %699 = vmatpush2.msra.mxu0 0.0
        %700 = vmatprep.subr.mxu0 0.0
        %701 = vmatpush2.msra.mxu0 0.0
        %702 = vmatprep.mubr.f32.mxu0 0.0
        %703 = vmatmul.mubr.f32.gmra.mxu0 %v636
        %v704 = vpop.f32.mrf.mxu0
        %v705 = vadd.f32 0.0, %v704
        %v706 = vpop.f32.mrf.mxu0
        %707 = vdwg.mxu0
        %v709 = vsel %vm378, %v632, 0
        %711 = vmatprep.subr.mxu0 0.0
        %712 = vmatpush1.msra.mxu0 0.0
        %713 = vmatprep.subr.mxu0 0.0
        %714 = vmatpush1.msra.mxu0 0.0
        %715 = vmatprep.subr.mxu0 0.0
        %716 = vmatpush1.msra.mxu0 0.0
        %717 = vmatprep.subr.mxu0 0.0
        %718 = vmatpush1.msra.mxu0 0.0
        %719 = vmatprep.subr.mxu0 0.0
        %720 = vmatpush1.msra.mxu0 0.0
        %721 = vmatprep.subr.mxu0 0.0
        %722 = vmatpush1.msra.mxu0 0.0
        %723 = vmatprep.subr.mxu0 0.0
        %724 = vmatpush1.msra.mxu0 0.0
        %725 = vmatprep.subr.mxu0 0.0
        %726 = vmatpush1.msra.mxu0 0.0
        %727 = vmatprep.subr.mxu0 0.0
        %728 = vmatpush1.msra.mxu0 0.0
        %729 = vmatprep.subr.mxu0 0.0
        %730 = vmatpush1.msra.mxu0 0.0
        %731 = vmatprep.subr.mxu0 0.0
        %732 = vmatpush1.msra.mxu0 0.0
        %733 = vmatprep.subr.mxu0 0.0
        %734 = vmatpush1.msra.mxu0 0.0
        %735 = vmatprep.subr.mxu0 0.0
        %736 = vmatpush1.msra.mxu0 0.0
        %737 = vmatprep.subr.mxu0 0.0
        %738 = vmatpush1.msra.mxu0 0.0
        %739 = vmatprep.subr.mxu0 0.0
        %740 = vmatpush1.msra.mxu0 0.0
        %741 = vmatprep.subr.mxu0 0.0
        %742 = vmatpush1.msra.mxu0 %v627
        %743 = vmatprep.subr.mxu0 0.0
        %744 = vmatpush2.msra.mxu0 0.0
        %745 = vmatprep.subr.mxu0 0.0
        %746 = vmatpush2.msra.mxu0 0.0
        %747 = vmatprep.subr.mxu0 0.0
        %748 = vmatpush2.msra.mxu0 0.0
        %749 = vmatprep.subr.mxu0 0.0
        %750 = vmatpush2.msra.mxu0 0.0
        %751 = vmatprep.subr.mxu0 0.0
        %752 = vmatpush2.msra.mxu0 0.0
        %753 = vmatprep.subr.mxu0 0.0
        %754 = vmatpush2.msra.mxu0 0.0
        %755 = vmatprep.subr.mxu0 0.0
        %756 = vmatpush2.msra.mxu0 0.0
        %757 = vmatprep.subr.mxu0 0.0
        %758 = vmatpush2.msra.mxu0 0.0
        %759 = vmatprep.subr.mxu0 0.0
        %760 = vmatpush2.msra.mxu0 0.0
        %761 = vmatprep.subr.mxu0 0.0
        %762 = vmatpush2.msra.mxu0 0.0
        %763 = vmatprep.subr.mxu0 0.0
        %764 = vmatpush2.msra.mxu0 0.0
        %765 = vmatprep.subr.mxu0 0.0
        %766 = vmatpush2.msra.mxu0 0.0
        %767 = vmatprep.subr.mxu0 0.0
        %768 = vmatpush2.msra.mxu0 0.0
        %769 = vmatprep.subr.mxu0 0.0
        %770 = vmatpush2.msra.mxu0 0.0
        %771 = vmatprep.subr.mxu0 0.0
        %772 = vmatpush2.msra.mxu0 0.0
        %773 = vmatprep.subr.mxu0 0.0
        %774 = vmatpush2.msra.mxu0 0.0
        %775 = vmatprep.mubr.f32.mxu0 0.0
        %776 = vmatmul.mubr.f32.gmra.mxu0 %v709
        %v777 = vpop.f32.mrf.mxu0
        %v778 = vadd.f32 %v705, %v777
        %v779 = vpop.f32.mrf.mxu0
        %780 = vdwg.mxu0
        %s781 = scalar_lea.vmem %s7, 16
        %v782 = vld [vmem:[%s781] sm:$0xff]
        %v784 = vsel %vm378, %v782, 0
        %786 = vmatprep.subr.mxu0 0.0
        %787 = vmatpush1.msra.mxu0 0.0
        %788 = vmatprep.subr.mxu0 0.0
        %789 = vmatpush1.msra.mxu0 0.0
        %790 = vmatprep.subr.mxu0 0.0
        %791 = vmatpush1.msra.mxu0 0.0
        %792 = vmatprep.subr.mxu0 0.0
        %793 = vmatpush1.msra.mxu0 0.0
        %794 = vmatprep.subr.mxu0 0.0
        %795 = vmatpush1.msra.mxu0 0.0
        %796 = vmatprep.subr.mxu0 0.0
        %797 = vmatpush1.msra.mxu0 0.0
        %798 = vmatprep.subr.mxu0 0.0
        %799 = vmatpush1.msra.mxu0 0.0
        %800 = vmatprep.subr.mxu0 0.0
        %801 = vmatpush1.msra.mxu0 0.0
        %802 = vmatprep.subr.mxu0 0.0
        %803 = vmatpush1.msra.mxu0 0.0
        %804 = vmatprep.subr.mxu0 0.0
        %805 = vmatpush1.msra.mxu0 0.0
        %806 = vmatprep.subr.mxu0 0.0
        %807 = vmatpush1.msra.mxu0 0.0
        %808 = vmatprep.subr.mxu0 0.0
        %809 = vmatpush1.msra.mxu0 0.0
        %810 = vmatprep.subr.mxu0 0.0
        %811 = vmatpush1.msra.mxu0 0.0
        %812 = vmatprep.subr.mxu0 0.0
        %813 = vmatpush1.msra.mxu0 0.0
        %814 = vmatprep.subr.mxu0 0.0
        %815 = vmatpush1.msra.mxu0 0.0
        %816 = vmatprep.subr.mxu0 0.0
        %817 = vmatpush1.msra.mxu0 %v631
        %818 = vmatprep.subr.mxu0 0.0
        %819 = vmatpush2.msra.mxu0 0.0
        %820 = vmatprep.subr.mxu0 0.0
        %821 = vmatpush2.msra.mxu0 0.0
        %822 = vmatprep.subr.mxu0 0.0
        %823 = vmatpush2.msra.mxu0 0.0
        %824 = vmatprep.subr.mxu0 0.0
        %825 = vmatpush2.msra.mxu0 0.0
        %826 = vmatprep.subr.mxu0 0.0
        %827 = vmatpush2.msra.mxu0 0.0
        %828 = vmatprep.subr.mxu0 0.0
        %829 = vmatpush2.msra.mxu0 0.0
        %830 = vmatprep.subr.mxu0 0.0
        %831 = vmatpush2.msra.mxu0 0.0
        %832 = vmatprep.subr.mxu0 0.0
        %833 = vmatpush2.msra.mxu0 0.0
        %834 = vmatprep.subr.mxu0 0.0
        %835 = vmatpush2.msra.mxu0 0.0
        %836 = vmatprep.subr.mxu0 0.0
        %837 = vmatpush2.msra.mxu0 0.0
        %838 = vmatprep.subr.mxu0 0.0
        %839 = vmatpush2.msra.mxu0 0.0
        %840 = vmatprep.subr.mxu0 0.0
        %841 = vmatpush2.msra.mxu0 0.0
        %842 = vmatprep.subr.mxu0 0.0
        %843 = vmatpush2.msra.mxu0 0.0
        %844 = vmatprep.subr.mxu0 0.0
        %845 = vmatpush2.msra.mxu0 0.0
        %846 = vmatprep.subr.mxu0 0.0
        %847 = vmatpush2.msra.mxu0 0.0
        %848 = vmatprep.subr.mxu0 0.0
        %849 = vmatpush2.msra.mxu0 0.0
        %850 = vmatprep.mubr.f32.mxu0 0.0
        %851 = vmatmul.mubr.f32.gmra.mxu0 %v784
        %v852 = vpop.f32.mrf.mxu0
        %v853 = vadd.f32 0.0, %v852
        %v854 = vpop.f32.mrf.mxu0
        %855 = vdwg.mxu0
        %v856 = vadd.f32 %v778, %v853
        %v857 = vld [vmem:[%s8] sm:$0xff]
        %859 = vset.pattern.permute.xlu0 0
        %860 = vperm.xlu0 %859, %v857
        %v861 = vpop.permute.xlu0 %860
        %v863 = vadd.f32 %v856, %v861
        %v864 = vadd.f32 %v348, %v863
        %vm865 = vcmask 130048
        %866 = vst.msk [vmem:[%s347] sm:$0xff] %vm865, %v864
        %s867 = sand.u32 %s228, 1
        %s868 = scalar_lea.sflag [#allocation4], %s867
        %s869 = sand.u32 %s228, 1
        %s870 = smul.addr %s869, 8
        %s871 = scalar_lea.vmem [#allocation5], %s870
        // Predicated region
        $region61: #{tpu_custom_call.1} parent=55 // pred_check
          %p872 = pneg %p238
        $region62: #{tpu_custom_call.1} parent=55 // pred_check_branch
          %874 = sbr.rel (%p872) target = $region64
        $region63: #{tpu_custom_call.1} parent=55 // pred_region
          %s876 = ssub.s32 128, 128
          %877 = vsyncadd %s868, %s876
          %s878 = smul.addr %s26, 128
          %s879 = scalar_lea.hbm %s9, %s878
          %s881 = sshll.u32 %s871, 4
          %s882 = int_to_ptr.vmem [resolvable:$true] %s881
          %884 = dma.vmem_to_hbm [thread:$0]  %s882, 128, %s879, %s868
        $region64: #{tpu_custom_call.1} parent=55 // pred_fallthru
          _
      $region56: #{tpu_custom_call.1} parent=5 // pred_fallthru
        _
      %p885 = scmp.le.s32.totalorder 2, %s21
      // Predicated region
      $region65: #{tpu_custom_call.1} parent=5 // pred_check
        %p886 = pneg %p885
      $region66: #{tpu_custom_call.1} parent=5 // pred_check_branch
        %888 = sbr.rel (%p886) target = $region68
      $region67: #{tpu_custom_call.1} parent=5 // pred_region
        %s889 = ssub.s32 %s21, 2
        // Predicated region
        $region69: #{tpu_custom_call.1} parent=67 // pred_check
          %p890 = pneg %p244
        $region70: #{tpu_custom_call.1} parent=67 // pred_check_branch
          %892 = sbr.rel (%p890) target = $region72
        $region71: #{tpu_custom_call.1} parent=67 // pred_region
          %s893 = sand.u32 %s229, 1
          %s894 = scalar_lea.sflag [#allocation4], %s893
          %s895 = sand.u32 %s229, 1
          %s896 = smul.addr %s895, 8
          %s897 = scalar_lea.vmem [#allocation5], %s896
          %898 = dma.done %s894, 128
        $region72: #{tpu_custom_call.1} parent=67 // pred_fallthru
          _
      $region68: #{tpu_custom_call.1} parent=5 // pred_fallthru
        _
    $region6: #{tpu_custom_call.1} parent=1 // loop_footer
      %s25 = sadd.s32 1, %s21
    $region7: #{tpu_custom_call.1} parent=1 // loop_footer_branch
      %20 = sbr.rel target = $region3
    $region8: #{tpu_custom_call.1} parent=1 // loop_exit
      _
    %899 = vsyncpa [#allocation3], 1
    %s900 = scalar_lea.sflag [#allocation3], 1
    %901 = vsyncpa %s900, 1
    %902 = vsyncpa [#allocation4], 1
    %s903 = scalar_lea.sflag [#allocation4], 1
    %904 = vsyncpa %s903, 1

</llo_original>
